<compile_context>
chip_gen: v7x
topology: tpu7x:2x2x1
jax: 0.10.0
libtpu: 0.0.40
codegen_flags: <defaults>
</compile_context>

<pallas_src>
import functools

import jax
import jax.numpy as jnp
import numpy as np
from jax import lax
from jax.experimental import pallas as pl
from jax.experimental.pallas import tpu as pltpu


def _gpt_sa_kernel(tok_sel_ref, pos_sel_ref, emb_ref, wqkv_ref, wlm_ref,
                   blm_ref, bias_ref, out_ref, *, BT, H, HPAD, E):
    """Embedding gather + causal single-head attention + lm_head, one shot.

    tok_sel_ref : (B*T, 1) int32   token id per row (indexes rows [0, V) of emb)
    pos_sel_ref : (B*T, 1) int32   V + time index per row (rows [V, V+T) of emb)
    emb_ref     : (V+T, C)         [tok_emb ; pos_emb[:T]] stacked
    wqkv_ref    : (C, 3*HPAD)      fused qkv weights, each head 0-padded to 128 lanes
    wlm_ref     : (HPAD, VPAD)     lm_head weight, zero-padded rows/cols
    blm_ref     : (1, VPAD)        lm_head bias, zero-padded
    bias_ref    : (B*T, B*T)       0 where (same batch & causal), -1e30 elsewhere
    out_ref     : (B*T, VPAD)      padded logits (lane-dense store)
    """
    # Fused embedding lookup: one-hot selection matmul == tok_emb[idx] + pos_emb[t].
    col = lax.broadcasted_iota(jnp.int32, (BT, E), 1)
    onehot = (col == tok_sel_ref[...]) | (col == pos_sel_ref[...])
    x = jnp.dot(onehot.astype(jnp.float32), emb_ref[...],
                preferred_element_type=jnp.float32)                    # (BT, C)

    # One fused MXU matmul for q, k, v; slices land on 128-lane boundaries.
    qkv = jnp.dot(x, wqkv_ref[...], preferred_element_type=jnp.float32)  # (BT, 3*HPAD)
    q = qkv[:, 0 * HPAD:1 * HPAD]
    k = qkv[:, 1 * HPAD:2 * HPAD]
    v = qkv[:, 2 * HPAD:3 * HPAD]

    # Scores for the whole batch at once; zero-padded head dims contribute 0.
    scale = jnp.float32(1.0) / jnp.sqrt(jnp.float32(H))
    dn = (((1,), (1,)), ((), ()))            # contract head dims == q @ k.T
    wei = lax.dot_general(q, k, dimension_numbers=dn,
                          preferred_element_type=jnp.float32) * scale   # (BT, BT)
    wei = wei + bias_ref[...]                # block-diagonal causal mask (additive)

    # Row softmax (masked entries ~ -1e30 -> exp == 0).
    m = jnp.max(wei, axis=-1, keepdims=True)
    e = jnp.exp(wei - m)
    s = jnp.sum(e, axis=-1, keepdims=True)
    p = e * pl.reciprocal(s, approx=True)    # divide -> EUP slot

    attn = jnp.dot(p, v, preferred_element_type=jnp.float32)            # (BT, HPAD)

    # lm_head; VPAD is a multiple of 128 -> unmasked, lane-dense stores.
    out_ref[...] = jnp.dot(attn, wlm_ref[...],
                           preferred_element_type=jnp.float32) + blm_ref[...]


def gpt_forward(idx, params):
    """Forward pass of Gpt (targets=None path). Returns (logits (B,T,V), None)."""
    tok_emb = params["tok_emb"]            # (vocab_size, n_embd)
    pos_emb = params["pos_emb"]            # (max_len, n_embd)
    wk, wq, wv = params["wk"], params["wq"], params["wv"]   # (n_embd, head_size)
    wlm, blm = params["wlm"], params["blm"]                 # (head_size, V), (1, V)

    B, T = idx.shape
    V, C = tok_emb.shape
    H = wk.shape[1]
    Vout = wlm.shape[1]
    BT = B * T

    HPAD = 128                                   # one lane group per projection
    VPAD = ((Vout + 127) // 128) * 128
    E = V + T                                    # rows of the stacked embedding

    # ---- static (numpy) prep: selectors & block-diagonal causal mask ----
    pos_sel = jnp.asarray(
        (V + np.tile(np.arange(T, dtype=np.int32), B)).reshape(BT, 1))
    r = np.arange(BT)
    same_batch = (r[:, None] // T) == (r[None, :] // T)
    causal = (r[None, :] % T) <= (r[:, None] % T)
    bias = jnp.asarray(
        np.where(same_batch & causal, 0.0, -1e30).astype(np.float32))   # (BT, BT)

    # ---- weight-side prep (pad to lane-dense shapes) ----
    def pad_cols(w, n):
        return jnp.pad(w, ((0, 0), (0, n - w.shape[1])))

    wqkv = jnp.concatenate(
        [pad_cols(wq, HPAD), pad_cols(wk, HPAD), pad_cols(wv, HPAD)],
        axis=1).astype(jnp.float32)                                     # (C, 3*HPAD)
    wlm_p = jnp.pad(wlm, ((0, HPAD - H), (0, VPAD - Vout))).astype(jnp.float32)
    blm_p = jnp.pad(blm, ((0, 0), (0, VPAD - Vout))).astype(jnp.float32)
    emb_cat = jnp.concatenate([tok_emb, pos_emb[:T]], axis=0).astype(jnp.float32)

    tok_sel = idx.reshape(BT, 1).astype(jnp.int32)

    kernel = functools.partial(_gpt_sa_kernel, BT=BT, H=H, HPAD=HPAD, E=E)

    # Single gridless invocation: every operand is a full-array VMEM block.
    logits_pad = pl.pallas_call(
        kernel,
        out_shape=jax.ShapeDtypeStruct((BT, VPAD), jnp.float32),
        in_specs=[
            pl.BlockSpec(memory_space=pltpu.MemorySpace.VMEM),   # tok_sel
            pl.BlockSpec(memory_space=pltpu.MemorySpace.VMEM),   # pos_sel
            pl.BlockSpec(memory_space=pltpu.MemorySpace.VMEM),   # emb_cat
            pl.BlockSpec(memory_space=pltpu.MemorySpace.VMEM),   # wqkv (padded)
            pl.BlockSpec(memory_space=pltpu.MemorySpace.VMEM),   # wlm (padded)
            pl.BlockSpec(memory_space=pltpu.MemorySpace.VMEM),   # blm (padded)
            pl.BlockSpec(memory_space=pltpu.MemorySpace.VMEM),   # causal bias
        ],
        out_specs=pl.BlockSpec(memory_space=pltpu.MemorySpace.VMEM),
    )(tok_sel, pos_sel, emb_cat, wqkv, wlm_p, blm_p, bias)

    # TODO(synk): let the consumer read the padded (B*T, VPAD) slab directly;
    # the slice+reshape below is only for the reference-shaped return value.
    logits = logits_pad[:, :Vout].reshape(B, T, Vout)
    loss = None  # targets=None path (cross-entropy branch not exercised)
    return logits, loss


def init_params(key, vocab_size, head_size, n_embd, max_len):
    ks = jax.random.split(key, 7)
    return {
        "tok_emb": jax.random.normal(ks[0], (vocab_size, n_embd), jnp.float32),
        "pos_emb": jax.random.normal(ks[1], (max_len, n_embd), jnp.float32),
        # nn.Linear(n_embd, head_size, bias=False): stored as (in, out)
        "wk": jax.random.normal(ks[2], (n_embd, head_size), jnp.float32) * 0.02,
        "wq": jax.random.normal(ks[3], (n_embd, head_size), jnp.float32) * 0.02,
        "wv": jax.random.normal(ks[4], (n_embd, head_size), jnp.float32) * 0.02,
        # nn.Linear(head_size, vocab_size) with bias
        "wlm": jax.random.normal(ks[5], (head_size, vocab_size), jnp.float32) * 0.02,
        "blm": jax.random.normal(ks[6], (1, vocab_size), jnp.float32) * 0.02,
    }


def _reference(idx, params):
    """Pure-JAX replica of the PyTorch forward (targets=None)."""
    T = idx.shape[1]
    x = jnp.take(params["tok_emb"], idx, axis=0) + params["pos_emb"][:T][None]
    k = x @ params["wk"]
    q = x @ params["wq"]
    v = x @ params["wv"]
    wei = (q @ jnp.swapaxes(k, -1, -2)) * (params["wk"].shape[1] ** -0.5)
    tril = jnp.tril(jnp.ones((T, T), jnp.float32))
    wei = jnp.where(tril == 0, -jnp.inf, wei)
    wei = jax.nn.softmax(wei, axis=-1)
    out = wei @ v
    return out @ params["wlm"] + params["blm"][0]


if __name__ == "__main__":
    # small, module-consistent shapes
    vocab_size = 64
    head_size = 16
    n_embd = 32
    max_len = 8
    dropout = 0.0   # unused in forward (Head never applies it)
    B, T = 2, 8

    key = jax.random.PRNGKey(0)
    pkey, ikey = jax.random.split(key)
    params = init_params(pkey, vocab_size, head_size, n_embd, max_len)
    idx = jax.random.randint(ikey, (B, T), 0, vocab_size, dtype=jnp.int32)

    logits, loss = gpt_forward(idx, params)
    logits = jax.block_until_ready(logits)

    assert logits.shape == (B, T, vocab_size)
    assert loss is None

    ref = jax.block_until_ready(_reference(idx, params))
    assert np.allclose(np.asarray(logits), np.asarray(ref), rtol=2e-2, atol=2e-3), (
        "kernel output mismatch vs reference")

    print("KERNEL_OK")
</pallas_src>

<mosaic_0001>
module attributes {stable_mosaic.version = 11 : i64} {
  func.func @_gpt_sa_kernel(%arg0: memref<16x1xi32, #tpu.memory_space<vmem>>, %arg1: memref<16x1xi32, #tpu.memory_space<vmem>>, %arg2: memref<72x32xf32, #tpu.memory_space<vmem>>, %arg3: memref<32x384xf32, #tpu.memory_space<vmem>>, %arg4: memref<128x128xf32, #tpu.memory_space<vmem>>, %arg5: memref<1x128xf32, #tpu.memory_space<vmem>>, %arg6: memref<16x16xf32, #tpu.memory_space<vmem>>, %arg7: memref<16x128xf32, #tpu.memory_space<vmem>>) attributes {dimension_semantics = [], scalar_prefetch = 0 : i64, scratch_operands = 0 : i64, tpu.core_type = #tpu.core_type<tc>} {
    %0 = tpu.iota {dimensions = array<i32: 1>} : vector<16x72xi32>
    %c0 = arith.constant 0 : index
    %c0_0 = arith.constant 0 : index
    %1 = vector.load %arg0[%c0, %c0_0] : memref<16x1xi32, #tpu.memory_space<vmem>>, vector<16x1xi32>
    %2 = vector.broadcast %1 : vector<16x1xi32> to vector<16x72xi32>
    %3 = arith.cmpi eq, %0, %2 : vector<16x72xi32>
    %c0_1 = arith.constant 0 : index
    %c0_2 = arith.constant 0 : index
    %4 = vector.load %arg1[%c0_1, %c0_2] : memref<16x1xi32, #tpu.memory_space<vmem>>, vector<16x1xi32>
    %5 = vector.broadcast %4 : vector<16x1xi32> to vector<16x72xi32>
    %6 = arith.cmpi eq, %0, %5 : vector<16x72xi32>
    %7 = arith.ori %3, %6 : vector<16x72xi1>
    %8 = arith.extui %7 : vector<16x72xi1> to vector<16x72xi32>
    %9 = arith.sitofp %8 : vector<16x72xi32> to vector<16x72xf32>
    %c0_3 = arith.constant 0 : index
    %c0_4 = arith.constant 0 : index
    %10 = vector.load %arg2[%c0_3, %c0_4] : memref<72x32xf32, #tpu.memory_space<vmem>>, vector<72x32xf32>
    %cst = arith.constant dense<0.000000e+00> : vector<16x32xf32>
    %11 = tpu.matmul %9, %10, %cst {dimension_numbers = #tpu.dot_dimension_numbers<[1], [0], [0], [1], [0, 0, 1, 1], [], []>} : vector<16x72xf32>, vector<72x32xf32>, vector<16x32xf32> -> vector<16x32xf32>
    %c0_5 = arith.constant 0 : index
    %c0_6 = arith.constant 0 : index
    %12 = vector.load %arg3[%c0_5, %c0_6] : memref<32x384xf32, #tpu.memory_space<vmem>>, vector<32x384xf32>
    %cst_7 = arith.constant dense<0.000000e+00> : vector<16x384xf32>
    %13 = tpu.matmul %11, %12, %cst_7 {dimension_numbers = #tpu.dot_dimension_numbers<[1], [0], [0], [1], [0, 0, 1, 1], [], []>} : vector<16x32xf32>, vector<32x384xf32>, vector<16x384xf32> -> vector<16x384xf32>
    %14 = vector.extract_strided_slice %13 {offsets = [0, 0], sizes = [16, 128], strides = [1, 1]} : vector<16x384xf32> to vector<16x128xf32>
    %15 = vector.extract_strided_slice %13 {offsets = [0, 128], sizes = [16, 128], strides = [1, 1]} : vector<16x384xf32> to vector<16x128xf32>
    %16 = vector.extract_strided_slice %13 {offsets = [0, 256], sizes = [16, 128], strides = [1, 1]} : vector<16x384xf32> to vector<16x128xf32>
    %cst_8 = arith.constant 1.600000e+01 : f32
    %17 = math.sqrt %cst_8 : f32
    %cst_9 = arith.constant 1.000000e+00 : f32
    %18 = arith.divf %cst_9, %17 : f32
    %cst_10 = arith.constant dense<0.000000e+00> : vector<16x16xf32>
    %19 = tpu.matmul %14, %15, %cst_10 {dimension_numbers = #tpu.dot_dimension_numbers<[1], [1], [0], [0], [0, 0, 1, 0], [], []>} : vector<16x128xf32>, vector<16x128xf32>, vector<16x16xf32> -> vector<16x16xf32>
    %20 = vector.broadcast %18 : f32 to vector<16x16xf32>
    %21 = arith.mulf %19, %20 : vector<16x16xf32>
    %c0_11 = arith.constant 0 : index
    %c0_12 = arith.constant 0 : index
    %22 = vector.load %arg6[%c0_11, %c0_12] : memref<16x16xf32, #tpu.memory_space<vmem>>, vector<16x16xf32>
    %23 = arith.addf %21, %22 : vector<16x16xf32>
    %cst_13 = arith.constant dense<0xFF800000> : vector<16xf32>
    %24 = vector.multi_reduction <maximumf>, %23, %cst_13 [1] : vector<16x16xf32> to vector<16xf32>
    %25 = vector.shape_cast %24 : vector<16xf32> to vector<16x1xf32>
    %26 = vector.broadcast %25 : vector<16x1xf32> to vector<16x16xf32>
    %27 = arith.subf %23, %26 : vector<16x16xf32>
    %28 = math.exp %27 : vector<16x16xf32>
    %cst_14 = arith.constant dense<0.000000e+00> : vector<16xf32>
    %29 = vector.multi_reduction <add>, %28, %cst_14 [1] : vector<16x16xf32> to vector<16xf32>
    %30 = vector.shape_cast %29 : vector<16xf32> to vector<16x1xf32>
    %31 = tpu.reciprocal %30 {approx = true} : vector<16x1xf32> -> vector<16x1xf32>
    %32 = vector.broadcast %31 : vector<16x1xf32> to vector<16x16xf32>
    %33 = arith.mulf %28, %32 : vector<16x16xf32>
    %cst_15 = arith.constant dense<0.000000e+00> : vector<16x128xf32>
    %34 = tpu.matmul %33, %16, %cst_15 {dimension_numbers = #tpu.dot_dimension_numbers<[1], [0], [0], [1], [0, 0, 1, 1], [], []>} : vector<16x16xf32>, vector<16x128xf32>, vector<16x128xf32> -> vector<16x128xf32>
    %c0_16 = arith.constant 0 : index
    %c0_17 = arith.constant 0 : index
    %35 = vector.load %arg4[%c0_16, %c0_17] : memref<128x128xf32, #tpu.memory_space<vmem>>, vector<128x128xf32>
    %cst_18 = arith.constant dense<0.000000e+00> : vector<16x128xf32>
    %36 = tpu.matmul %34, %35, %cst_18 {dimension_numbers = #tpu.dot_dimension_numbers<[1], [0], [0], [1], [0, 0, 1, 1], [], []>} : vector<16x128xf32>, vector<128x128xf32>, vector<16x128xf32> -> vector<16x128xf32>
    %c0_19 = arith.constant 0 : index
    %c0_20 = arith.constant 0 : index
    %37 = vector.load %arg5[%c0_19, %c0_20] : memref<1x128xf32, #tpu.memory_space<vmem>>, vector<1x128xf32>
    %38 = vector.broadcast %37 : vector<1x128xf32> to vector<16x128xf32>
    %39 = arith.addf %36, %38 : vector<16x128xf32>
    %c0_21 = arith.constant 0 : index
    %c0_22 = arith.constant 0 : index
    %40 = vector.load %arg7[%c0_21, %c0_22] : memref<16x128xf32, #tpu.memory_space<vmem>>, vector<16x128xf32>
    tpu.vector_store %arg7[%c0_21, %c0_22], %39 {strides = array<i32>} : memref<16x128xf32, #tpu.memory_space<vmem>>, vector<16x128xf32>,
    return
  }
}

</mosaic_0001>

<llo_original>
// kernel: tpu_custom_call.1
$region0: #{tpu_custom_call.1}
  #allocation0 [shape = 'u32[]', space=smem, size = 0x4, offset = 0x4, fixed_abs, tag = 'smem constant byte address 0x4 - core index']
  #allocation1 [shape = 'u32[144,128]{1,0:T(1,128)}', space=vmem, size = 0x12000, scoped, tag = 'internal scratch']
  %s0 = inlined_call_operand.vmem [shape: s32[16,1], index: 0, kind: input, shape index: {}]
  %s1 = inlined_call_operand.vmem [shape: s32[16,1], index: 1, kind: input, shape index: {}]
  %s2 = inlined_call_operand.vmem [shape: f32[72,32], index: 2, kind: input, shape index: {}]
  %s3 = inlined_call_operand.hbm [shape: f32[32,384], index: 3, kind: input, shape index: {}]
  %s4 = inlined_call_operand.vmem [shape: f32[128,128], index: 4, kind: input, shape index: {}]
  %s5 = inlined_call_operand.vmem [shape: f32[1,128], index: 5, kind: input, shape index: {}]
  %s6 = inlined_call_operand.vmem [shape: f32[16,16], index: 6, kind: input, shape index: {}]
  %s7 = inlined_call_operand.hbm [shape: f32[16,128], index: 7, kind: output, shape index: {}]
  %s8 = sld [smem:[#allocation0]]
  $region42: #{tpu_custom_call.1} parent=0
    _
  %s10 = ssub.s32 1, %s8
  %s11 = scalar_select 0, %s10, %s8
  $region1: #{tpu_custom_call.1} parent=0
    #allocation2 [shape = 'u8[49152]{0}', space=vmem, size = 0xc000, scoped, tag = 'input window, operand 3, single buffered']
    #allocation3 [shape = 's32[1]{0}', space=sflag, size = 0x4, scoped, tag = 'scoped memory for tpu_custom_call.1']
    #allocation4 [shape = 's32[1]{0}', space=sflag, size = 0x4, scoped, tag = 'scoped memory for tpu_custom_call.1']
    #allocation5 [shape = 'u8[8192]{0}', space=vmem, size = 0x2000, scoped, tag = 'output window, operand 0, single buffered']
    %12 = vsyncpa [#allocation3], 0
    %13 = vsyncpa [#allocation4], 0
    // Predicated region
    $region2: #{tpu_custom_call.1} parent=1 // pred_check
      _
    $region3: #{tpu_custom_call.1} parent=1 // pred_check_branch
      %15 = sbr.rel (0) target = $region5
    $region4: #{tpu_custom_call.1} parent=1 // pred_region
      _
    $region5: #{tpu_custom_call.1} parent=1 // pred_fallthru
      _
    // Predicated region
    $region6: #{tpu_custom_call.1} parent=1 // pred_check
      _
    $region7: #{tpu_custom_call.1} parent=1 // pred_check_branch
      %17 = sbr.rel (0) target = $region9
    $region8: #{tpu_custom_call.1} parent=1 // pred_region
      _
    $region9: #{tpu_custom_call.1} parent=1 // pred_fallthru
      _
    // Predicated region
    $region10: #{tpu_custom_call.1} parent=1 // pred_check
      _
    $region11: #{tpu_custom_call.1} parent=1 // pred_check_branch
      %19 = sbr.rel (0) target = $region13
    $region12: #{tpu_custom_call.1} parent=1 // pred_region
      _
    $region13: #{tpu_custom_call.1} parent=1 // pred_fallthru
      _
    // Predicated region
    $region14: #{tpu_custom_call.1} parent=1 // pred_check
      _
    $region15: #{tpu_custom_call.1} parent=1 // pred_check_branch
      %21 = sbr.rel (0) target = $region17
    $region16: #{tpu_custom_call.1} parent=1 // pred_region
      %s23 = ssub.s32 1536, 1536
      %24 = vsyncadd [#allocation3], %s23
      %s25 = sshll.u32 [#allocation2], 4
      %s26 = int_to_ptr.vmem [resolvable:$true] %s25
      %31 = dma.hbm_to_vmem [thread:$0]  %s3, 1536, %s26, [#allocation3], 384, 384, 24
    $region17: #{tpu_custom_call.1} parent=1 // pred_fallthru
      _
    // Predicated region
    $region18: #{tpu_custom_call.1} parent=1 // pred_check
      _
    $region19: #{tpu_custom_call.1} parent=1 // pred_check_branch
      %33 = sbr.rel (0) target = $region21
    $region20: #{tpu_custom_call.1} parent=1 // pred_region
      _
    $region21: #{tpu_custom_call.1} parent=1 // pred_fallthru
      _
    // Predicated region
    $region22: #{tpu_custom_call.1} parent=1 // pred_check
      _
    $region23: #{tpu_custom_call.1} parent=1 // pred_check_branch
      %35 = sbr.rel (0) target = $region25
    $region24: #{tpu_custom_call.1} parent=1 // pred_region
      _
    $region25: #{tpu_custom_call.1} parent=1 // pred_fallthru
      _
    // Predicated region
    $region26: #{tpu_custom_call.1} parent=1 // pred_check
      _
    $region27: #{tpu_custom_call.1} parent=1 // pred_check_branch
      %37 = sbr.rel (0) target = $region29
    $region28: #{tpu_custom_call.1} parent=1 // pred_region
      _
    $region29: #{tpu_custom_call.1} parent=1 // pred_fallthru
      _
    // Predicated region
    $region30: #{tpu_custom_call.1} parent=1 // pred_check
      _
    $region31: #{tpu_custom_call.1} parent=1 // pred_check_branch
      %39 = sbr.rel (0) target = $region33
    $region32: #{tpu_custom_call.1} parent=1 // pred_region
      %40 = dma.done [#allocation3], 1536
    $region33: #{tpu_custom_call.1} parent=1 // pred_fallthru
      _
    %v41 = vlaneseq
    %v42 = vand.u32 %v41, 127
    %v43 = vld [vmem:[%s0] sm:$0xff]
    %v44 = vld [vmem:[%s0 + $0x8] sm:$0xff]
    %45 = vset.pattern.permute.xlu0 0
    %46 = vperm.xlu0 %45, %v43
    %v47 = vpop.permute.xlu0 %46
    %48 = vset.pattern.permute.xlu0 0
    %49 = vperm.xlu0 %48, %v44
    %v50 = vpop.permute.xlu0 %49
    %vm51 = vcmp.eq.s32.totalorder %v42, %v47
    %vm52 = vcmp.eq.s32.totalorder %v42, %v50
    %v53 = vld [vmem:[%s1] sm:$0xff]
    %v54 = vld [vmem:[%s1 + $0x8] sm:$0xff]
    %55 = vset.pattern.permute.xlu0 0
    %56 = vperm.xlu0 %55, %v53
    %v57 = vpop.permute.xlu0 %56
    %58 = vset.pattern.permute.xlu0 0
    %59 = vperm.xlu0 %58, %v54
    %v60 = vpop.permute.xlu0 %59
    %vm61 = vcmp.eq.s32.totalorder %v42, %v57
    %vm62 = vcmp.eq.s32.totalorder %v42, %v60
    %vm63 = vmor %vm51, %vm61
    %vm64 = vmor %vm52, %vm62
    %v65 = vsel %vm63, 1, 0
    %v66 = vsel %vm64, 1, 0
    %v67 = vcvt.s32.f32 %v65
    %v68 = vcvt.s32.f32 %v66
    %v69 = vld [vmem:[%s2] sm:$0xff]
    %v70 = vld [vmem:[%s2 + $0x8] sm:$0xff]
    %v71 = vld [vmem:[%s2 + $0x10] sm:$0xff]
    %v72 = vld [vmem:[%s2 + $0x18] sm:$0xff]
    %v73 = vld [vmem:[%s2 + $0x20] sm:$0xff]
    %v74 = vld [vmem:[%s2 + $0x28] sm:$0xff]
    %v75 = vld [vmem:[%s2 + $0x30] sm:$0xff]
    %v76 = vld [vmem:[%s2 + $0x38] sm:$0xff]
    %v77 = vld [vmem:[%s2 + $0x40] sm:$0xff]
    %vm78 = vcmask 588800
    %v80 = vsel %vm78, %v67, 0
    %v83 = vsel %vm78, %v68, 0
    %85 = vmatprep.subr.mxu0 0.0
    %86 = vmatpush1.msra.mxu0 %v69
    %87 = vmatprep.subr.mxu0 0.0
    %88 = vmatpush1.msra.mxu0 %v70
    %89 = vmatprep.subr.mxu0 0.0
    %90 = vmatpush1.msra.mxu0 %v71
    %91 = vmatprep.subr.mxu0 0.0
    %92 = vmatpush1.msra.mxu0 %v72
    %93 = vmatprep.subr.mxu0 0.0
    %94 = vmatpush1.msra.mxu0 %v73
    %95 = vmatprep.subr.mxu0 0.0
    %96 = vmatpush1.msra.mxu0 %v74
    %97 = vmatprep.subr.mxu0 0.0
    %98 = vmatpush1.msra.mxu0 %v75
    %99 = vmatprep.subr.mxu0 0.0
    %100 = vmatpush1.msra.mxu0 %v76
    %101 = vmatprep.subr.mxu0 0.0
    %102 = vmatpush1.msra.mxu0 %v77
    %103 = vmatprep.subr.mxu0 0.0
    %104 = vmatpush1.msra.mxu0 0.0
    %105 = vmatprep.subr.mxu0 0.0
    %106 = vmatpush1.msra.mxu0 0.0
    %107 = vmatprep.subr.mxu0 0.0
    %108 = vmatpush1.msra.mxu0 0.0
    %109 = vmatprep.subr.mxu0 0.0
    %110 = vmatpush1.msra.mxu0 0.0
    %111 = vmatprep.subr.mxu0 0.0
    %112 = vmatpush1.msra.mxu0 0.0
    %113 = vmatprep.subr.mxu0 0.0
    %114 = vmatpush1.msra.mxu0 0.0
    %115 = vmatprep.subr.mxu0 0.0
    %116 = vmatpush1.msra.mxu0 0.0
    %117 = vmatprep.subr.mxu0 0.0
    %118 = vmatpush1.msra.mxu0 0.0
    %119 = vmatprep.subr.mxu0 0.0
    %120 = vmatpush1.msra.mxu0 0.0
    %121 = vmatprep.subr.mxu0 0.0
    %122 = vmatpush1.msra.mxu0 0.0
    %123 = vmatprep.subr.mxu0 0.0
    %124 = vmatpush1.msra.mxu0 0.0
    %125 = vmatprep.subr.mxu0 0.0
    %126 = vmatpush1.msra.mxu0 0.0
    %127 = vmatprep.subr.mxu0 0.0
    %128 = vmatpush1.msra.mxu0 0.0
    %129 = vmatprep.subr.mxu0 0.0
    %130 = vmatpush1.msra.mxu0 0.0
    %131 = vmatprep.subr.mxu0 0.0
    %132 = vmatpush1.msra.mxu0 0.0
    %133 = vmatprep.subr.mxu0 0.0
    %134 = vmatpush1.msra.mxu0 0.0
    %135 = vmatprep.subr.mxu0 0.0
    %136 = vmatpush1.msra.mxu0 0.0
    %137 = vmatprep.subr.mxu0 0.0
    %138 = vmatpush1.msra.mxu0 0.0
    %139 = vmatprep.subr.mxu0 0.0
    %140 = vmatpush1.msra.mxu0 0.0
    %141 = vmatprep.subr.mxu0 0.0
    %142 = vmatpush1.msra.mxu0 0.0
    %143 = vmatprep.subr.mxu0 0.0
    %144 = vmatpush1.msra.mxu0 0.0
    %145 = vmatprep.subr.mxu0 0.0
    %146 = vmatpush1.msra.mxu0 0.0
    %147 = vmatprep.subr.mxu0 0.0
    %148 = vmatpush1.msra.mxu0 0.0
    %149 = vmatprep.mubr.f32.mxu0 0.0
    %150 = vmatmul.mubr.f32.gmra.mrb[0].mxu0 %v80
    %v151 = vpop.f32.mrb[0].mxu0
    %v152 = vadd.f32 0.0, %v151
    %v153 = vpop.f32.mrb[0].mxu0
    %154 = vmatprep.mubr.f32.mxu0 0.0
    %155 = vmatmul.mubr.f32.gmra.mrb[0].mxu0 %v83
    %v156 = vpop.f32.mrb[0].mxu0
    %v157 = vadd.f32 0.0, %v156
    %v158 = vpop.f32.mrb[0].mxu0
    %159 = vdwg.mxu0
    %v160 = vld [vmem:[#allocation2] sm:$0xff]
    %v161 = vld [vmem:[#allocation2 + $0x8] sm:$0xff]
    %v162 = vld [vmem:[#allocation2 + $0x10] sm:$0xff]
    %v163 = vld [vmem:[#allocation2 + $0x18] sm:$0xff]
    %v164 = vld [vmem:[#allocation2 + $0x20] sm:$0xff]
    %v165 = vld [vmem:[#allocation2 + $0x28] sm:$0xff]
    %v166 = vld [vmem:[#allocation2 + $0x30] sm:$0xff]
    %v167 = vld [vmem:[#allocation2 + $0x38] sm:$0xff]
    %v168 = vld [vmem:[#allocation2 + $0x40] sm:$0xff]
    %v169 = vld [vmem:[#allocation2 + $0x48] sm:$0xff]
    %v170 = vld [vmem:[#allocation2 + $0x50] sm:$0xff]
    %v171 = vld [vmem:[#allocation2 + $0x58] sm:$0xff]
    %vm172 = vcmask 261120
    %v174 = vsel %vm172, %v152, 0
    %v177 = vsel %vm172, %v157, 0
    %179 = vmatprep.subr.mxu0 %v161
    %180 = vmatpush1.msra.mxu0 %v160
    %181 = vmatprep.subr.mxu0 %v164
    %182 = vmatpush1.msra.mxu0 %v163
    %183 = vmatprep.subr.mxu0 %v167
    %184 = vmatpush1.msra.mxu0 %v166
    %185 = vmatprep.subr.mxu0 %v170
    %186 = vmatpush1.msra.mxu0 %v169
    %187 = vmatprep.subr.mxu0 0.0
    %188 = vmatpush1.msra.mxu0 0.0
    %189 = vmatprep.subr.mxu0 0.0
    %190 = vmatpush1.msra.mxu0 0.0
    %191 = vmatprep.subr.mxu0 0.0
    %192 = vmatpush1.msra.mxu0 0.0
    %193 = vmatprep.subr.mxu0 0.0
    %194 = vmatpush1.msra.mxu0 0.0
    %195 = vmatprep.subr.mxu0 0.0
    %196 = vmatpush1.msra.mxu0 0.0
    %197 = vmatprep.subr.mxu0 0.0
    %198 = vmatpush1.msra.mxu0 0.0
    %199 = vmatprep.subr.mxu0 0.0
    %200 = vmatpush1.msra.mxu0 0.0
    %201 = vmatprep.subr.mxu0 0.0
    %202 = vmatpush1.msra.mxu0 0.0
    %203 = vmatprep.subr.mxu0 0.0
    %204 = vmatpush1.msra.mxu0 0.0
    %205 = vmatprep.subr.mxu0 0.0
    %206 = vmatpush1.msra.mxu0 0.0
    %207 = vmatprep.subr.mxu0 0.0
    %208 = vmatpush1.msra.mxu0 0.0
    %209 = vmatprep.subr.mxu0 0.0
    %210 = vmatpush1.msra.mxu0 0.0
    %211 = vmatprep.subr.mxu0 0.0
    %212 = vmatpush1.msra.mxu0 0.0
    %213 = vmatprep.subr.mxu0 0.0
    %214 = vmatpush1.msra.mxu0 0.0
    %215 = vmatprep.subr.mxu0 0.0
    %216 = vmatpush1.msra.mxu0 0.0
    %217 = vmatprep.subr.mxu0 0.0
    %218 = vmatpush1.msra.mxu0 0.0
    %219 = vmatprep.subr.mxu0 0.0
    %220 = vmatpush1.msra.mxu0 0.0
    %221 = vmatprep.subr.mxu0 0.0
    %222 = vmatpush1.msra.mxu0 0.0
    %223 = vmatprep.subr.mxu0 0.0
    %224 = vmatpush1.msra.mxu0 0.0
    %225 = vmatprep.subr.mxu0 0.0
    %226 = vmatpush1.msra.mxu0 0.0
    %227 = vmatprep.subr.mxu0 0.0
    %228 = vmatpush1.msra.mxu0 0.0
    %229 = vmatprep.subr.mxu0 0.0
    %230 = vmatpush1.msra.mxu0 0.0
    %231 = vmatprep.subr.mxu0 0.0
    %232 = vmatpush1.msra.mxu0 0.0
    %233 = vmatprep.subr.mxu0 0.0
    %234 = vmatpush1.msra.mxu0 0.0
    %235 = vmatprep.subr.mxu0 0.0
    %236 = vmatpush1.msra.mxu0 0.0
    %237 = vmatprep.subr.mxu0 0.0
    %238 = vmatpush1.msra.mxu0 0.0
    %239 = vmatprep.subr.mxu0 0.0
    %240 = vmatpush1.msra.mxu0 0.0
    %241 = vmatprep.subr.mxu0 0.0
    %242 = vmatpush1.msra.mxu0 0.0
    %243 = vmatprep.mubr.f32.mxu0 0.0
    %244 = vmatmul.mubr.f32.gmra.mrb[0].mxu0 %v174
    %v245 = vpop.f32.mrb[0].mxu0
    %v246 = vadd.f32 0.0, %v245
    %v247 = vpop.f32.mrb[0].mxu0
    %v248 = vadd.f32 0.0, %v247
    %249 = vmatprep.mubr.f32.mxu0 0.0
    %250 = vmatmul.mubr.f32.gmra.mrb[0].mxu0 %v177
    %v251 = vpop.f32.mrb[0].mxu0
    %v252 = vadd.f32 0.0, %v251
    %v253 = vpop.f32.mrb[0].mxu0
    %v254 = vadd.f32 0.0, %v253
    %255 = vdwg.mxu0
    %256 = vmatprep.subr.mxu0 0.0
    %257 = vmatpush1.msra.mxu0 %v162
    %258 = vmatprep.subr.mxu0 0.0
    %259 = vmatpush1.msra.mxu0 %v165
    %260 = vmatprep.subr.mxu0 0.0
    %261 = vmatpush1.msra.mxu0 %v168
    %262 = vmatprep.subr.mxu0 0.0
    %263 = vmatpush1.msra.mxu0 %v171
    %264 = vmatprep.subr.mxu0 0.0
    %265 = vmatpush1.msra.mxu0 0.0
    %266 = vmatprep.subr.mxu0 0.0
    %267 = vmatpush1.msra.mxu0 0.0
    %268 = vmatprep.subr.mxu0 0.0
    %269 = vmatpush1.msra.mxu0 0.0
    %270 = vmatprep.subr.mxu0 0.0
    %271 = vmatpush1.msra.mxu0 0.0
    %272 = vmatprep.subr.mxu0 0.0
    %273 = vmatpush1.msra.mxu0 0.0
    %274 = vmatprep.subr.mxu0 0.0
    %275 = vmatpush1.msra.mxu0 0.0
    %276 = vmatprep.subr.mxu0 0.0
    %277 = vmatpush1.msra.mxu0 0.0
    %278 = vmatprep.subr.mxu0 0.0
    %279 = vmatpush1.msra.mxu0 0.0
    %280 = vmatprep.subr.mxu0 0.0
    %281 = vmatpush1.msra.mxu0 0.0
    %282 = vmatprep.subr.mxu0 0.0
    %283 = vmatpush1.msra.mxu0 0.0
    %284 = vmatprep.subr.mxu0 0.0
    %285 = vmatpush1.msra.mxu0 0.0
    %286 = vmatprep.subr.mxu0 0.0
    %287 = vmatpush1.msra.mxu0 0.0
    %288 = vmatprep.subr.mxu0 0.0
    %289 = vmatpush1.msra.mxu0 0.0
    %290 = vmatprep.subr.mxu0 0.0
    %291 = vmatpush1.msra.mxu0 0.0
    %292 = vmatprep.subr.mxu0 0.0
    %293 = vmatpush1.msra.mxu0 0.0
    %294 = vmatprep.subr.mxu0 0.0
    %295 = vmatpush1.msra.mxu0 0.0
    %296 = vmatprep.subr.mxu0 0.0
    %297 = vmatpush1.msra.mxu0 0.0
    %298 = vmatprep.subr.mxu0 0.0
    %299 = vmatpush1.msra.mxu0 0.0
    %300 = vmatprep.subr.mxu0 0.0
    %301 = vmatpush1.msra.mxu0 0.0
    %302 = vmatprep.subr.mxu0 0.0
    %303 = vmatpush1.msra.mxu0 0.0
    %304 = vmatprep.subr.mxu0 0.0
    %305 = vmatpush1.msra.mxu0 0.0
    %306 = vmatprep.subr.mxu0 0.0
    %307 = vmatpush1.msra.mxu0 0.0
    %308 = vmatprep.subr.mxu0 0.0
    %309 = vmatpush1.msra.mxu0 0.0
    %310 = vmatprep.subr.mxu0 0.0
    %311 = vmatpush1.msra.mxu0 0.0
    %312 = vmatprep.subr.mxu0 0.0
    %313 = vmatpush1.msra.mxu0 0.0
    %314 = vmatprep.subr.mxu0 0.0
    %315 = vmatpush1.msra.mxu0 0.0
    %316 = vmatprep.subr.mxu0 0.0
    %317 = vmatpush1.msra.mxu0 0.0
    %318 = vmatprep.subr.mxu0 0.0
    %319 = vmatpush1.msra.mxu0 0.0
    %320 = vmatprep.mubr.f32.mxu0 0.0
    %321 = vmatmul.mubr.f32.gmra.mrb[0].mxu0 %v174
    %v322 = vpop.f32.mrb[0].mxu0
    %v323 = vadd.f32 0.0, %v322
    %v324 = vpop.f32.mrb[0].mxu0
    %325 = vmatprep.mubr.f32.mxu0 0.0
    %326 = vmatmul.mubr.f32.gmra.mrb[0].mxu0 %v177
    %v327 = vpop.f32.mrb[0].mxu0
    %v328 = vadd.f32 0.0, %v327
    %v329 = vpop.f32.mrb[0].mxu0
    %330 = vdwg.mxu0
    %331 = vmatprep.subr.mxu0 0.0
    %332 = vmatpush1.xpose.msra.mxu0 %v248
    %333 = vmatprep.subr.mxu0 0.0
    %334 = vmatpush1.xpose.msra.mxu0 %v254
    %335 = vmatprep.subr.mxu0 0.0
    %336 = vmatpush1.xpose.msra.mxu0 0.0
    %337 = vmatprep.subr.mxu0 0.0
    %338 = vmatpush1.xpose.msra.mxu0 0.0
    %339 = vmatprep.subr.mxu0 0.0
    %340 = vmatpush1.xpose.msra.mxu0 0.0
    %341 = vmatprep.subr.mxu0 0.0
    %342 = vmatpush1.xpose.msra.mxu0 0.0
    %343 = vmatprep.subr.mxu0 0.0
    %344 = vmatpush1.xpose.msra.mxu0 0.0
    %345 = vmatprep.subr.mxu0 0.0
    %346 = vmatpush1.xpose.msra.mxu0 0.0
    %347 = vmatprep.subr.mxu0 0.0
    %348 = vmatpush1.xpose.msra.mxu0 0.0
    %349 = vmatprep.subr.mxu0 0.0
    %350 = vmatpush1.xpose.msra.mxu0 0.0
    %351 = vmatprep.subr.mxu0 0.0
    %352 = vmatpush1.xpose.msra.mxu0 0.0
    %353 = vmatprep.subr.mxu0 0.0
    %354 = vmatpush1.xpose.msra.mxu0 0.0
    %355 = vmatprep.subr.mxu0 0.0
    %356 = vmatpush1.xpose.msra.mxu0 0.0
    %357 = vmatprep.subr.mxu0 0.0
    %358 = vmatpush1.xpose.msra.mxu0 0.0
    %359 = vmatprep.subr.mxu0 0.0
    %360 = vmatpush1.xpose.msra.mxu0 0.0
    %361 = vmatprep.subr.mxu0 0.0
    %362 = vmatpush1.xpose.msra.mxu0 0.0
    %363 = vmatprep.subr.mxu0 0.0
    %364 = vmatpush1.xpose.msra.mxu0 0.0
    %365 = vmatprep.subr.mxu0 0.0
    %366 = vmatpush1.xpose.msra.mxu0 0.0
    %367 = vmatprep.subr.mxu0 0.0
    %368 = vmatpush1.xpose.msra.mxu0 0.0
    %369 = vmatprep.subr.mxu0 0.0
    %370 = vmatpush1.xpose.msra.mxu0 0.0
    %371 = vmatprep.subr.mxu0 0.0
    %372 = vmatpush1.xpose.msra.mxu0 0.0
    %373 = vmatprep.subr.mxu0 0.0
    %374 = vmatpush1.xpose.msra.mxu0 0.0
    %375 = vmatprep.subr.mxu0 0.0
    %376 = vmatpush1.xpose.msra.mxu0 0.0
    %377 = vmatprep.subr.mxu0 0.0
    %378 = vmatpush1.xpose.msra.mxu0 0.0
    %379 = vmatprep.subr.mxu0 0.0
    %380 = vmatpush1.xpose.msra.mxu0 0.0
    %381 = vmatprep.subr.mxu0 0.0
    %382 = vmatpush1.xpose.msra.mxu0 0.0
    %383 = vmatprep.subr.mxu0 0.0
    %384 = vmatpush1.xpose.msra.mxu0 0.0
    %385 = vmatprep.subr.mxu0 0.0
    %386 = vmatpush1.xpose.msra.mxu0 0.0
    %387 = vmatprep.subr.mxu0 0.0
    %388 = vmatpush1.xpose.msra.mxu0 0.0
    %389 = vmatprep.subr.mxu0 0.0
    %390 = vmatpush1.xpose.msra.mxu0 0.0
    %391 = vmatprep.subr.mxu0 0.0
    %392 = vmatpush1.xpose.msra.mxu0 0.0
    %393 = vmatprep.subr.mxu0 0.0
    %394 = vmatpush1.xpose.msra.mxu0 0.0
    %395 = vmatprep.mubr.f32.mxu0 0.0
    %396 = vmatmul.mubr.f32.gmra.mrb[0].mxu0 %v246
    %v397 = vpop.f32.mrb[0].mxu0
    %v398 = vadd.f32 0.0, %v397
    %v399 = vpop.f32.mrb[0].mxu0
    %400 = vmatprep.mubr.f32.mxu0 0.0
    %401 = vmatmul.mubr.f32.gmra.mrb[0].mxu0 %v252
    %v402 = vpop.f32.mrb[0].mxu0
    %v403 = vadd.f32 0.0, %v402
    %v404 = vpop.f32.mrb[0].mxu0
    %405 = vdwg.mxu0
    %v406 = vmul.f32 %v398, 0.25
    %v407 = vmul.f32 %v403, 0.25
    %v408 = vld [vmem:[%s6] sm:$0xff]
    %v409 = vld [vmem:[%s6 + $0x8] sm:$0xff]
    %v410 = vadd.f32 %v406, %v408
    %v411 = vadd.f32 %v407, %v409
    %vm412 = vcmask 130048
    %v413 = vsel %vm412, %v410, -inf
    %414 = vmax.xlane.f32.xlu0 %v413
    %v415 = vpop.xlane.xlu0 %414
    %v416 = vsel %vm412, %v411, -inf
    %417 = vmax.xlane.f32.xlu0 %v416
    %v418 = vpop.xlane.xlu0 %417
    %v419 = vsub.f32 %v410, %v415
    %v420 = vsub.f32 %v411, %v418
    %v421 = vmul.f32 %v419, 1.442695
    %v422 = vpow.pop %v421
    %v423 = vmul.f32 %v420, 1.442695
    %v424 = vpow.pop %v423
    %v425 = vsel %vm412, %v422, 0.0
    %426 = vadd.xlane.f32.xlu0 %v425
    %v427 = vpop.xlane.xlu0 %426
    %v428 = vsel %vm412, %v424, 0.0
    %429 = vadd.xlane.f32.xlu0 %v428
    %v430 = vpop.xlane.xlu0 %429
    %v431 = vrcp.pop %v427
    %v432 = vrcp.pop %v430
    %v433 = vmul.f32 %v422, %v431
    %v434 = vmul.f32 %v424, %v432
    %v436 = vsel %vm412, %v433, 0
    %v439 = vsel %vm412, %v434, 0
    %441 = vmatprep.subr.mxu0 0.0
    %442 = vmatpush1.msra.mxu0 %v323
    %443 = vmatprep.subr.mxu0 0.0
    %444 = vmatpush1.msra.mxu0 %v328
    %445 = vmatprep.subr.mxu0 0.0
    %446 = vmatpush1.msra.mxu0 0.0
    %447 = vmatprep.subr.mxu0 0.0
    %448 = vmatpush1.msra.mxu0 0.0
    %449 = vmatprep.subr.mxu0 0.0
    %450 = vmatpush1.msra.mxu0 0.0
    %451 = vmatprep.subr.mxu0 0.0
    %452 = vmatpush1.msra.mxu0 0.0
    %453 = vmatprep.subr.mxu0 0.0
    %454 = vmatpush1.msra.mxu0 0.0
    %455 = vmatprep.subr.mxu0 0.0
    %456 = vmatpush1.msra.mxu0 0.0
    %457 = vmatprep.subr.mxu0 0.0
    %458 = vmatpush1.msra.mxu0 0.0
    %459 = vmatprep.subr.mxu0 0.0
    %460 = vmatpush1.msra.mxu0 0.0
    %461 = vmatprep.subr.mxu0 0.0
    %462 = vmatpush1.msra.mxu0 0.0
    %463 = vmatprep.subr.mxu0 0.0
    %464 = vmatpush1.msra.mxu0 0.0
    %465 = vmatprep.subr.mxu0 0.0
    %466 = vmatpush1.msra.mxu0 0.0
    %467 = vmatprep.subr.mxu0 0.0
    %468 = vmatpush1.msra.mxu0 0.0
    %469 = vmatprep.subr.mxu0 0.0
    %470 = vmatpush1.msra.mxu0 0.0
    %471 = vmatprep.subr.mxu0 0.0
    %472 = vmatpush1.msra.mxu0 0.0
    %473 = vmatprep.subr.mxu0 0.0
    %474 = vmatpush1.msra.mxu0 0.0
    %475 = vmatprep.subr.mxu0 0.0
    %476 = vmatpush1.msra.mxu0 0.0
    %477 = vmatprep.subr.mxu0 0.0
    %478 = vmatpush1.msra.mxu0 0.0
    %479 = vmatprep.subr.mxu0 0.0
    %480 = vmatpush1.msra.mxu0 0.0
    %481 = vmatprep.subr.mxu0 0.0
    %482 = vmatpush1.msra.mxu0 0.0
    %483 = vmatprep.subr.mxu0 0.0
    %484 = vmatpush1.msra.mxu0 0.0
    %485 = vmatprep.subr.mxu0 0.0
    %486 = vmatpush1.msra.mxu0 0.0
    %487 = vmatprep.subr.mxu0 0.0
    %488 = vmatpush1.msra.mxu0 0.0
    %489 = vmatprep.subr.mxu0 0.0
    %490 = vmatpush1.msra.mxu0 0.0
    %491 = vmatprep.subr.mxu0 0.0
    %492 = vmatpush1.msra.mxu0 0.0
    %493 = vmatprep.subr.mxu0 0.0
    %494 = vmatpush1.msra.mxu0 0.0
    %495 = vmatprep.subr.mxu0 0.0
    %496 = vmatpush1.msra.mxu0 0.0
    %497 = vmatprep.subr.mxu0 0.0
    %498 = vmatpush1.msra.mxu0 0.0
    %499 = vmatprep.subr.mxu0 0.0
    %500 = vmatpush1.msra.mxu0 0.0
    %501 = vmatprep.subr.mxu0 0.0
    %502 = vmatpush1.msra.mxu0 0.0
    %503 = vmatprep.subr.mxu0 0.0
    %504 = vmatpush1.msra.mxu0 0.0
    %505 = vmatprep.mubr.f32.mxu0 0.0
    %506 = vmatmul.mubr.f32.gmra.mrb[0].mxu0 %v436
    %v507 = vpop.f32.mrb[0].mxu0
    %v508 = vadd.f32 0.0, %v507
    %v509 = vpop.f32.mrb[0].mxu0
    %510 = vmatprep.mubr.f32.mxu0 0.0
    %511 = vmatmul.mubr.f32.gmra.mrb[0].mxu0 %v439
    %v512 = vpop.f32.mrb[0].mxu0
    %v513 = vadd.f32 0.0, %v512
    %v514 = vpop.f32.mrb[0].mxu0
    %515 = vdwg.mxu0
    %v516 = vld [vmem:[%s4] sm:$0xff]
    %v517 = vld [vmem:[%s4 + $0x8] sm:$0xff]
    %v518 = vld [vmem:[%s4 + $0x10] sm:$0xff]
    %v519 = vld [vmem:[%s4 + $0x18] sm:$0xff]
    %v520 = vld [vmem:[%s4 + $0x20] sm:$0xff]
    %v521 = vld [vmem:[%s4 + $0x28] sm:$0xff]
    %v522 = vld [vmem:[%s4 + $0x30] sm:$0xff]
    %v523 = vld [vmem:[%s4 + $0x38] sm:$0xff]
    %v524 = vld [vmem:[%s4 + $0x40] sm:$0xff]
    %v525 = vld [vmem:[%s4 + $0x48] sm:$0xff]
    %v526 = vld [vmem:[%s4 + $0x50] sm:$0xff]
    %v527 = vld [vmem:[%s4 + $0x58] sm:$0xff]
    %v528 = vld [vmem:[%s4 + $0x60] sm:$0xff]
    %v529 = vld [vmem:[%s4 + $0x68] sm:$0xff]
    %v530 = vld [vmem:[%s4 + $0x70] sm:$0xff]
    %v531 = vld [vmem:[%s4 + $0x78] sm:$0xff]
    %v532 = vld [vmem:[%s5] sm:$0x1]
    %v534 = vlaneseq
    %v535 = vshrl.u32 %v534, 7
    %v536 = vsub.s32 0, %v535
    %v537 = vrot.slane %v532, %v536
    %539 = vmatprep.subr.mxu0 0.0
    %540 = vmatpush1.msra.mxu0 %v516
    %541 = vmatprep.subr.mxu0 0.0
    %542 = vmatpush1.msra.mxu0 %v517
    %543 = vmatprep.subr.mxu0 0.0
    %544 = vmatpush1.msra.mxu0 %v518
    %545 = vmatprep.subr.mxu0 0.0
    %546 = vmatpush1.msra.mxu0 %v519
    %547 = vmatprep.subr.mxu0 0.0
    %548 = vmatpush1.msra.mxu0 %v520
    %549 = vmatprep.subr.mxu0 0.0
    %550 = vmatpush1.msra.mxu0 %v521
    %551 = vmatprep.subr.mxu0 0.0
    %552 = vmatpush1.msra.mxu0 %v522
    %553 = vmatprep.subr.mxu0 0.0
    %554 = vmatpush1.msra.mxu0 %v523
    %555 = vmatprep.subr.mxu0 0.0
    %556 = vmatpush1.msra.mxu0 %v524
    %557 = vmatprep.subr.mxu0 0.0
    %558 = vmatpush1.msra.mxu0 %v525
    %559 = vmatprep.subr.mxu0 0.0
    %560 = vmatpush1.msra.mxu0 %v526
    %561 = vmatprep.subr.mxu0 0.0
    %562 = vmatpush1.msra.mxu0 %v527
    %563 = vmatprep.subr.mxu0 0.0
    %564 = vmatpush1.msra.mxu0 %v528
    %565 = vmatprep.subr.mxu0 0.0
    %566 = vmatpush1.msra.mxu0 %v529
    %567 = vmatprep.subr.mxu0 0.0
    %568 = vmatpush1.msra.mxu0 %v530
    %569 = vmatprep.subr.mxu0 0.0
    %570 = vmatpush1.msra.mxu0 %v531
    %571 = vmatprep.subr.mxu0 0.0
    %572 = vmatpush1.msra.mxu0 0.0
    %573 = vmatprep.subr.mxu0 0.0
    %574 = vmatpush1.msra.mxu0 0.0
    %575 = vmatprep.subr.mxu0 0.0
    %576 = vmatpush1.msra.mxu0 0.0
    %577 = vmatprep.subr.mxu0 0.0
    %578 = vmatpush1.msra.mxu0 0.0
    %579 = vmatprep.subr.mxu0 0.0
    %580 = vmatpush1.msra.mxu0 0.0
    %581 = vmatprep.subr.mxu0 0.0
    %582 = vmatpush1.msra.mxu0 0.0
    %583 = vmatprep.subr.mxu0 0.0
    %584 = vmatpush1.msra.mxu0 0.0
    %585 = vmatprep.subr.mxu0 0.0
    %586 = vmatpush1.msra.mxu0 0.0
    %587 = vmatprep.subr.mxu0 0.0
    %588 = vmatpush1.msra.mxu0 0.0
    %589 = vmatprep.subr.mxu0 0.0
    %590 = vmatpush1.msra.mxu0 0.0
    %591 = vmatprep.subr.mxu0 0.0
    %592 = vmatpush1.msra.mxu0 0.0
    %593 = vmatprep.subr.mxu0 0.0
    %594 = vmatpush1.msra.mxu0 0.0
    %595 = vmatprep.subr.mxu0 0.0
    %596 = vmatpush1.msra.mxu0 0.0
    %597 = vmatprep.subr.mxu0 0.0
    %598 = vmatpush1.msra.mxu0 0.0
    %599 = vmatprep.subr.mxu0 0.0
    %600 = vmatpush1.msra.mxu0 0.0
    %601 = vmatprep.subr.mxu0 0.0
    %602 = vmatpush1.msra.mxu0 0.0
    %603 = vmatprep.mubr.f32.mxu0 0.0
    %604 = vmatmul.mubr.f32.gmra.mrb[0].mxu0 %v508
    %v605 = vpop.f32.mrb[0].mxu0
    %v606 = vadd.f32 %v537, %v605
    %v607 = vpop.f32.mrb[0].mxu0
    %608 = vmatprep.mubr.f32.mxu0 0.0
    %609 = vmatmul.mubr.f32.gmra.mrb[0].mxu0 %v513
    %v610 = vpop.f32.mrb[0].mxu0
    %v611 = vadd.f32 %v537, %v610
    %v612 = vpop.f32.mrb[0].mxu0
    %613 = vdwg.mxu0
    %614 = vst [vmem:[#allocation5] sm:$0xff] %v606
    %615 = vst [vmem:[#allocation5 + $0x8] sm:$0xff] %v611
    // Predicated region
    $region34: #{tpu_custom_call.1} parent=1 // pred_check
      _
    $region35: #{tpu_custom_call.1} parent=1 // pred_check_branch
      %617 = sbr.rel (0) target = $region37
    $region36: #{tpu_custom_call.1} parent=1 // pred_region
      %s619 = ssub.s32 256, 256
      %620 = vsyncadd [#allocation4], %s619
      %s621 = sshll.u32 [#allocation5], 4
      %s622 = int_to_ptr.vmem [resolvable:$true] %s621
      %627 = dma.vmem_to_hbm [thread:$0]  %s622, 256, %s7, [#allocation4], 128, 128, 8
    $region37: #{tpu_custom_call.1} parent=1 // pred_fallthru
      _
    // Predicated region
    $region38: #{tpu_custom_call.1} parent=1 // pred_check
      _
    $region39: #{tpu_custom_call.1} parent=1 // pred_check_branch
      %629 = sbr.rel (0) target = $region41
    $region40: #{tpu_custom_call.1} parent=1 // pred_region
      %630 = dma.done [#allocation4], 256
    $region41: #{tpu_custom_call.1} parent=1 // pred_fallthru
      _
    %631 = vsyncpa [#allocation3], 1
    %632 = vsyncpa [#allocation4], 1

</llo_original>
